<compile_context>
chip_gen: v7x
topology: tpu7x:2x2x1
jax: 0.10.0
libtpu: 0.0.40
codegen_flags: <defaults>
</compile_context>

<pallas_src>
import functools

import jax
import jax.numpy as jnp
from jax import lax
from jax.experimental import pallas as pl
from jax.experimental.pallas import tpu as pltpu


# --------------------------------------------------------------------------- #
# Kernels
# --------------------------------------------------------------------------- #

def _proj_kernel(x_ref, w_ref, b_ref, *out_refs):
    """Linear projection tile: one grid step == one (batch, sequence-tile) pair.

      x     : (1, TS, E)    bf16
      w     : (E, n*F)      bf16   (pre-transposed, possibly QKV-packed)
      b     : (1, n*F)      f32
      out_i : (1, TS, F)    bf16   columns [i*F:(i+1)*F] of the packed result
    """
    acc = jnp.dot(x_ref[0], w_ref[...],
                  preferred_element_type=jnp.float32) + b_ref[...]      # (TS, n*F) f32
    f = out_refs[0].shape[-1]
    for i, o_ref in enumerate(out_refs):
        # bf16 result written directly -> no f32 (S,E) temporaries outlive the dot.
        o_ref[0] = acc[:, i * f:(i + 1) * f].astype(o_ref.dtype)


def _attn_kernel(*refs, num_heads: int, head_dim: int, has_mask: bool):
    """Attention + output projection: one grid step == one (batch, query-tile) pair.

      q    : (1, TQ, E)    bf16  (already scaled by head_dim**-0.5 via the projection)
      k, v : (1, Skv, E)   bf16
      mask : (1, TQ, Skv)  int8  (only when has_mask; 0 = masked)
      wo_t : (E, E)        bf16  (pre-transposed out_proj weight)
      bo   : (1, E)        f32
      out  : (1, TQ, E)
      ctx  : (TQ, E)       bf16 VMEM scratch (per-head context slab)
    """
    if has_mask:
        q_ref, k_ref, v_ref, mask_ref, wo_ref, bo_ref, out_ref, ctx_ref = refs
    else:
        q_ref, k_ref, v_ref, wo_ref, bo_ref, out_ref, ctx_ref = refs
        mask_ref = None

    # Additive mask, computed once and hoisted out of the head loop.
    # NOTE: a fully-masked row yields all -inf scores -> NaN softmax; this matches
    # the PyTorch reference footgun (kept for semantic parity).
    if mask_ref is not None:
        mask_add = jnp.where(mask_ref[0].astype(jnp.int32) == 0,
                             jnp.float32(-jnp.inf), jnp.float32(0.0))   # (TQ, Skv) f32
    else:
        mask_add = None

    qk_dims = (((1,), (1,)), ((), ()))   # q @ k.T without an in-kernel transpose

    # Static head loop (num_heads is small); each head reads only its D columns
    # from the refs and sinks its result into the ctx slab, so no (TQ,Skv)
    # intermediate has to stay live across heads.
    for h in range(num_heads):
        lo = h * head_dim
        hi = lo + head_dim
        qh = q_ref[0, :, lo:hi]                                          # (TQ, D)  bf16
        kh = k_ref[0, :, lo:hi]                                          # (Skv, D) bf16
        vh = v_ref[0, :, lo:hi]                                          # (Skv, D) bf16

        scores = lax.dot_general(qh, kh, qk_dims,
                                 preferred_element_type=jnp.float32)    # (TQ, Skv) f32
        if mask_add is not None:
            scores = scores + mask_add

        # Explicit f32 softmax; the divide goes to the EUP reciprocal slot.
        m = jnp.max(scores, axis=-1, keepdims=True)
        p = jnp.exp(scores - m)
        l = jnp.sum(p, axis=-1, keepdims=True)
        attn = p * pl.reciprocal(l, approx=True)
        # TODO(synk): training-mode dropout on `attn` would go here (inference: identity).

        head_val = jnp.dot(attn.astype(jnp.bfloat16), vh,
                           preferred_element_type=jnp.float32)          # (TQ, D) f32
        ctx_ref[:, lo:hi] = head_val.astype(jnp.bfloat16)

    # Single K=E output projection over the assembled context slab.
    out = jnp.dot(ctx_ref[...], wo_ref[...],
                  preferred_element_type=jnp.float32) + bo_ref[...]     # (TQ, E) f32
    out_ref[0] = out.astype(out_ref.dtype)


# --------------------------------------------------------------------------- #
# Wrapper helpers
# --------------------------------------------------------------------------- #

def _choose_tile(n: int, max_tile: int, *, want_programs: int = 1) -> int:
    """Largest tile t <= max_tile with t % 8 == 0 (or t == n) that divides n,
    preferring n // t >= want_programs (v7x: keep both TensorCores busy)."""
    cands = []
    if n <= max_tile:
        cands.append(n)
    cands += [d for d in range(8, min(n, max_tile) + 1, 8) if n % d == 0]
    if not cands:
        # No multiple-of-8 divisor <= max_tile: fall back to the full extent.
        # (Awkward prime-ish large S can blow VMEM here — documented limitation.)
        return n
    good = [d for d in cands if n // d >= want_programs]
    return max(good) if good else max(cands)


def _vmem_limit_bytes() -> int:
    """~75% of physical VMEM (headroom for double buffers / compiler temps):
    ~48 MiB on v7x, ~96 MiB on v5e/v6e.  Conservative fallback if the query fails."""
    try:
        cap = pltpu.get_tpu_info().vmem_capacity_bytes
    except Exception:  # info query only; never affects correctness
        cap = 64 * 1024 * 1024
    return max(32 * 1024 * 1024, (cap * 3) // 4)


def _project(x_bf, w_t_bf, b_f32, n_out, *, max_tile, vmem_limit):
    """x_bf: (B,S,E) bf16; w_t_bf: (E, n_out*F) bf16; b_f32: (1, n_out*F) f32.
    Returns a tuple of n_out bf16 arrays, each (B, S, F)."""
    B, S, E = x_bf.shape
    F = w_t_bf.shape[1] // n_out
    TS = _choose_tile(S, max_tile, want_programs=(2 if B == 1 else 1))
    grid = (B, S // TS)

    out_shape = tuple(jax.ShapeDtypeStruct((B, S, F), jnp.bfloat16)
                      for _ in range(n_out))
    out_specs = tuple(pl.BlockSpec((1, TS, F), lambda b, si: (b, si, 0))
                      for _ in range(n_out))

    cost = pl.CostEstimate(
        flops=2 * B * S * E * n_out * F,
        transcendentals=0,
        bytes_accessed=(2 * B * S * E + 2 * E * n_out * F + 4 * n_out * F
                        + 2 * B * S * n_out * F))

    return pl.pallas_call(
        _proj_kernel,
        out_shape=out_shape,
        grid_spec=pltpu.PrefetchScalarGridSpec(
            num_scalar_prefetch=0,
            grid=grid,
            in_specs=[pl.BlockSpec((1, TS, E), lambda b, si: (b, si, 0)),
                      pl.BlockSpec((E, n_out * F), lambda b, si: (0, 0)),
                      pl.BlockSpec((1, n_out * F), lambda b, si: (0, 0))],
            out_specs=out_specs),
        compiler_params=pltpu.CompilerParams(
            dimension_semantics=("parallel", "parallel"),
            vmem_limit_bytes=vmem_limit),
        cost_estimate=cost,
    )(x_bf, w_t_bf, b_f32)


def _attention(q_bf, k_bf, v_bf, mask_i8, wo_t_bf, bo_f32, out_dtype, *,
               num_heads, head_dim, max_q_tile, vmem_limit):
    B, Sq, E = q_bf.shape
    _, Skv, _ = k_bf.shape
    has_mask = mask_i8 is not None

    TQ = _choose_tile(Sq, max_q_tile, want_programs=(2 if B == 1 else 1))
    n_qt = Sq // TQ

    kernel = functools.partial(_attn_kernel, num_heads=num_heads,
                               head_dim=head_dim, has_mask=has_mask)

    in_specs = [pl.BlockSpec((1, TQ, E), lambda b, qi: (b, qi, 0)),    # q tile
                pl.BlockSpec((1, Skv, E), lambda b, qi: (b, 0, 0)),    # full K per batch
                pl.BlockSpec((1, Skv, E), lambda b, qi: (b, 0, 0))]    # full V per batch
    arrays = [q_bf, k_bf, v_bf]
    if has_mask:
        in_specs.append(pl.BlockSpec((1, TQ, Skv), lambda b, qi: (b, qi, 0)))
        arrays.append(mask_i8)
    in_specs += [pl.BlockSpec((E, E), lambda b, qi: (0, 0)),
                 pl.BlockSpec((1, E), lambda b, qi: (0, 0))]
    arrays += [wo_t_bf, bo_f32]

    cost = pl.CostEstimate(
        flops=B * (4 * Sq * Skv * E + 2 * Sq * E * E),
        transcendentals=B * num_heads * Sq * Skv,
        bytes_accessed=(2 * B * Sq * E + 2 * 2 * B * Skv * E
                        + (B * Sq * Skv if has_mask else 0)
                        + 2 * E * E + 4 * E + 4 * B * Sq * E))

    return pl.pallas_call(
        kernel,
        out_shape=jax.ShapeDtypeStruct((B, Sq, E), out_dtype),
        grid_spec=pltpu.PrefetchScalarGridSpec(
            num_scalar_prefetch=0,
            grid=(B, n_qt),
            in_specs=in_specs,
            out_specs=pl.BlockSpec((1, TQ, E), lambda b, qi: (b, qi, 0)),
            scratch_shapes=[pltpu.VMEM((TQ, E), jnp.bfloat16)]),
        compiler_params=pltpu.CompilerParams(
            dimension_semantics=("parallel", "parallel"),
            vmem_limit_bytes=vmem_limit),
        cost_estimate=cost,
    )(*arrays)


# --------------------------------------------------------------------------- #
# Public entry point
# --------------------------------------------------------------------------- #

def multi_head_attention(query, key, value, params, *, num_heads, mask=None,
                         max_q_tile=256, max_proj_tile=512):
    """query: (B,Sq,E); key/value: (B,Skv,E); mask: optional (B,Sq,Skv) (0 = masked)."""
    B, Sq, E = query.shape
    Bk, Skv, Ek = key.shape
    assert value.shape == key.shape and Ek == E and Bk == B
    assert E % num_heads == 0
    head_dim = E // num_heads
    scaling = float(head_dim) ** -0.5

    wq, bq = params["q_proj"]
    wk, bk = params["k_proj"]
    wv, bv = params["v_proj"]
    wo, bo = params["out_proj"]

    vmem_limit = _vmem_limit_bytes()

    # bf16 activations host-side: halves DMA bytes & VMEM for the big blocks.
    q_in = query.astype(jnp.bfloat16)

    self_attn = (query is key) and (key is value)
    kv_same = key is value

    if self_attn:
        # One fused x @ [Wq*s | Wk | Wv] projection (scaling folded into Q weights).
        w_pack = jnp.concatenate([wq.T * scaling, wk.T, wv.T], axis=1).astype(jnp.bfloat16)
        b_pack = jnp.concatenate([bq * scaling, bk, bv]).reshape(1, 3 * E).astype(jnp.float32)
        q_bf, k_bf, v_bf = _project(q_in, w_pack, b_pack, 3,
                                    max_tile=max_proj_tile, vmem_limit=vmem_limit)
    else:
        wq_t = (wq.T * scaling).astype(jnp.bfloat16)
        bq2 = (bq * scaling).reshape(1, E).astype(jnp.float32)
        (q_bf,) = _project(q_in, wq_t, bq2, 1,
                           max_tile=max_proj_tile, vmem_limit=vmem_limit)
        kv_in = key.astype(jnp.bfloat16)
        if kv_same:
            w_kv = jnp.concatenate([wk.T, wv.T], axis=1).astype(jnp.bfloat16)
            b_kv = jnp.concatenate([bk, bv]).reshape(1, 2 * E).astype(jnp.float32)
            k_bf, v_bf = _project(kv_in, w_kv, b_kv, 2,
                                  max_tile=max_proj_tile, vmem_limit=vmem_limit)
        else:
            (k_bf,) = _project(kv_in, wk.T.astype(jnp.bfloat16),
                               bk.reshape(1, E).astype(jnp.float32), 1,
                               max_tile=max_proj_tile, vmem_limit=vmem_limit)
            (v_bf,) = _project(value.astype(jnp.bfloat16), wv.T.astype(jnp.bfloat16),
                               bv.reshape(1, E).astype(jnp.float32), 1,
                               max_tile=max_proj_tile, vmem_limit=vmem_limit)

    mask_i8 = None if mask is None else (mask != 0).astype(jnp.int8)
    wo_t = wo.T.astype(jnp.bfloat16)
    bo2 = bo.reshape(1, E).astype(jnp.float32)

    return _attention(q_bf, k_bf, v_bf, mask_i8, wo_t, bo2, query.dtype,
                      num_heads=num_heads, head_dim=head_dim,
                      max_q_tile=max_q_tile, vmem_limit=vmem_limit)


# --------------------------------------------------------------------------- #
# Reference + demo
# --------------------------------------------------------------------------- #

def _init_linear(key, in_dim, out_dim):
    """Deterministic nn.Linear-style init: U(-1/sqrt(in), 1/sqrt(in))."""
    kw, kb = jax.random.split(key)
    bound = 1.0 / (in_dim ** 0.5)
    w = jax.random.uniform(kw, (out_dim, in_dim), jnp.float32, -bound, bound)
    b = jax.random.uniform(kb, (out_dim,), jnp.float32, -bound, bound)
    return w, b


def _reference_mha(query, key, value, params, *, num_heads, mask=None):
    """Pure-JAX f32 reference mirroring the PyTorch forward (inference dropout)."""
    B, S, E = query.shape
    D = E // num_heads
    scaling = float(D) ** -0.5

    def lin(x, wb):
        w, b = wb
        return x @ w.T + b

    q = lin(query, params["q_proj"]).reshape(B, -1, num_heads, D).transpose(0, 2, 1, 3)
    k = lin(key, params["k_proj"]).reshape(B, -1, num_heads, D).transpose(0, 2, 1, 3)
    v = lin(value, params["v_proj"]).reshape(B, -1, num_heads, D).transpose(0, 2, 1, 3)
    scores = jnp.einsum("bhqd,bhkd->bhqk", q, k) * scaling
    if mask is not None:
        scores = jnp.where(mask[:, None, :, :] == 0, -jnp.inf, scores)
    attn = jax.nn.softmax(scores, axis=-1)
    vals = jnp.einsum("bhqk,bhkd->bhqd", attn, v)
    vals = vals.transpose(0, 2, 1, 3).reshape(B, S, E)
    return lin(vals, params["out_proj"])


if __name__ == "__main__":
    B, S, E, H = 2, 8, 32, 4

    root = jax.random.PRNGKey(0)
    k_q, k_k, k_v, k_o, k_xq, k_xk, k_xv = jax.random.split(root, 7)

    params = {
        "q_proj": _init_linear(k_q, E, E),
        "k_proj": _init_linear(k_k, E, E),
        "v_proj": _init_linear(k_v, E, E),
        "out_proj": _init_linear(k_o, E, E),
    }

    query = jax.random.normal(k_xq, (B, S, E), jnp.float32)
    key = jax.random.normal(k_xk, (B, S, E), jnp.float32)
    value = jax.random.normal(k_xv, (B, S, E), jnp.float32)
    # causal-ish mask to exercise the masking path (0 = masked position)
    mask = jnp.tile(jnp.tril(jnp.ones((S, S), jnp.float32))[None], (B, 1, 1))

    # Cross-attention path (separate q/k/v projections, int8 mask DMA).
    out = multi_head_attention(query, key, value, params, num_heads=H, mask=mask)
    out = jax.block_until_ready(out)
    ref = _reference_mha(query, key, value, params, num_heads=H, mask=mask)
    assert out.shape == (B, S, E)
    # bf16 MXU inputs (f32 accumulate) vs f32 reference: ~1% relative error expected.
    assert jnp.allclose(out, ref, atol=2e-2, rtol=2e-2), "mismatch vs reference (masked)"

    # Self-attention path (q is k is v): single fused x @ W_qkv projection, no mask DMA.
    out_sa = multi_head_attention(query, query, query, params, num_heads=H)
    out_sa = jax.block_until_ready(out_sa)
    ref_sa = _reference_mha(query, query, query, params, num_heads=H)
    assert jnp.allclose(out_sa, ref_sa, atol=2e-2, rtol=2e-2), "mismatch vs reference (self-attn)"

    print("KERNEL_OK")
</pallas_src>

<mosaic_0001>
module attributes {stable_mosaic.version = 11 : i64} {
  func.func @_proj_kernel(%arg0: i32, %arg1: i32, %arg2: memref<1x8x32xbf16, #tpu.memory_space<vmem>>, %arg3: memref<32x32xbf16, #tpu.memory_space<vmem>>, %arg4: memref<1x32xf32, #tpu.memory_space<vmem>>, %arg5: memref<1x8x32xbf16, #tpu.memory_space<vmem>>) attributes {dimension_semantics = [#tpu.dimension_semantics<parallel>, #tpu.dimension_semantics<parallel>], iteration_bounds = array<i64: 2, 1>, scalar_prefetch = 0 : i64, scratch_operands = 0 : i64, tpu.core_type = #tpu.core_type<tc>, window_params = [{transform_indices = @transform_0, window_bounds = array<i64: 1, 8, 32>}, {pipeline_mode = #tpu.pipeline_mode<synchronous>, transform_indices = @transform_1, window_bounds = array<i64: 32, 32>}, {pipeline_mode = #tpu.pipeline_mode<synchronous>, transform_indices = @transform_2, window_bounds = array<i64: 1, 32>}, {transform_indices = @transform_3, window_bounds = array<i64: 1, 8, 32>}]} {
    %c0 = arith.constant 0 : index
    %c0_0 = arith.constant 0 : index
    %c0_1 = arith.constant 0 : index
    %0 = vector.load %arg2[%c0, %c0_0, %c0_1] : memref<1x8x32xbf16, #tpu.memory_space<vmem>>, vector<1x8x32xbf16>
    %1 = vector.shape_cast %0 : vector<1x8x32xbf16> to vector<8x32xbf16>
    %c0_2 = arith.constant 0 : index
    %c0_3 = arith.constant 0 : index
    %2 = vector.load %arg3[%c0_2, %c0_3] : memref<32x32xbf16, #tpu.memory_space<vmem>>, vector<32x32xbf16>
    %cst = arith.constant dense<0.000000e+00> : vector<8x32xf32>
    %3 = tpu.matmul %1, %2, %cst {dimension_numbers = #tpu.dot_dimension_numbers<[1], [0], [0], [1], [0, 0, 1, 1], [], []>} : vector<8x32xbf16>, vector<32x32xbf16>, vector<8x32xf32> -> vector<8x32xf32>
    %c0_4 = arith.constant 0 : index
    %c0_5 = arith.constant 0 : index
    %4 = vector.load %arg4[%c0_4, %c0_5] : memref<1x32xf32, #tpu.memory_space<vmem>>, vector<1x32xf32>
    %5 = vector.broadcast %4 : vector<1x32xf32> to vector<8x32xf32>
    %6 = arith.addf %3, %5 : vector<8x32xf32>
    %7 = arith.truncf %6 : vector<8x32xf32> to vector<8x32xbf16>
    %c0_6 = arith.constant 0 : index
    %c0_7 = arith.constant 0 : index
    %c0_8 = arith.constant 0 : index
    %8 = vector.load %arg5[%c0_6, %c0_7, %c0_8] : memref<1x8x32xbf16, #tpu.memory_space<vmem>>, vector<1x8x32xbf16>
    %9 = vector.shape_cast %8 : vector<1x8x32xbf16> to vector<8x32xbf16>
    %10 = vector.shape_cast %7 : vector<8x32xbf16> to vector<1x8x32xbf16>
    tpu.vector_store %arg5[%c0_6, %c0_7, %c0_8], %10 {strides = array<i32>} : memref<1x8x32xbf16, #tpu.memory_space<vmem>>, vector<1x8x32xbf16>,
    return
  }
  func.func @transform_0(%arg0: i32, %arg1: i32) -> (i32, i32, i32) {
    %c0_i32 = arith.constant 0 : i32
    %c0_i32_0 = arith.constant 0 : i32
    return %arg0, %arg1, %c0_i32 : i32, i32, i32
  }
  func.func @transform_1(%arg0: i32, %arg1: i32) -> (i32, i32) {
    %c0_i32 = arith.constant 0 : i32
    %c0_i32_0 = arith.constant 0 : i32
    %c0_i32_1 = arith.constant 0 : i32
    return %c0_i32, %c0_i32_0 : i32, i32
  }
  func.func @transform_2(%arg0: i32, %arg1: i32) -> (i32, i32) {
    %c0_i32 = arith.constant 0 : i32
    %c0_i32_0 = arith.constant 0 : i32
    %c0_i32_1 = arith.constant 0 : i32
    return %c0_i32, %c0_i32_0 : i32, i32
  }
  func.func @transform_3(%arg0: i32, %arg1: i32) -> (i32, i32, i32) {
    %c0_i32 = arith.constant 0 : i32
    %c0_i32_0 = arith.constant 0 : i32
    return %arg0, %arg1, %c0_i32 : i32, i32, i32
  }
}

</mosaic_0001>

<llo_original>
// kernel: tpu_custom_call.1
$region0: #{tpu_custom_call.1}
  #allocation0 [shape = 'u32[]', space=smem, size = 0x4, offset = 0x4, fixed_abs, tag = 'smem constant byte address 0x4 - core index']
  #allocation1 [shape = 'u32[144,128]{1,0:T(1,128)}', space=vmem, size = 0x12000, scoped, tag = 'internal scratch']
  %s0 = inlined_call_operand.hbm [shape: bf16[2,8,32], index: 0, kind: input, shape index: {}]
  %s1 = inlined_call_operand.hbm [shape: bf16[32,32], index: 1, kind: input, shape index: {}]
  %s2 = inlined_call_operand.vmem [shape: f32[1,32], index: 2, kind: input, shape index: {}]
  %s3 = inlined_call_operand.hbm [shape: bf16[2,8,32], index: 3, kind: output, shape index: {}]
  %s4 = sld [smem:[#allocation0]]
  $region53: #{tpu_custom_call.1} parent=0
    _
  %s6 = ssub.s32 1, %s4
  %s7 = scalar_select 0, %s6, %s4
  $region1: #{tpu_custom_call.1} parent=0
    #allocation2 [shape = 'u8[4096]{0}', space=vmem, size = 0x1000, scoped, tag = 'input window, operand 0']
    #allocation3 [shape = 's32[2]{0}', space=sflag, size = 0x8, scoped, tag = 'scoped memory for tpu_custom_call.1']
    #allocation4 [shape = 's32[2]{0}', space=sflag, size = 0x8, scoped, tag = 'scoped memory for tpu_custom_call.1']
    #allocation5 [shape = 'u8[8192]{0}', space=vmem, size = 0x2000, scoped, tag = 'input window, operand 1, single buffered']
    #allocation6 [shape = 's32[1]{0}', space=sflag, size = 0x4, scoped, tag = 'scoped memory for tpu_custom_call.1']
    #allocation7 [shape = 'u8[4096]{0}', space=vmem, size = 0x1000, scoped, tag = 'output window, operand 0']
    %8 = vsyncpa [#allocation3], 0
    %s9 = scalar_lea.sflag [#allocation3], 1
    %10 = vsyncpa %s9, 0
    %11 = vsyncpa [#allocation6], 0
    %12 = vsyncpa [#allocation4], 0
    %s13 = scalar_lea.sflag [#allocation4], 1
    %14 = vsyncpa %s13, 0
    loop: start=0, step=1, limit=4
    $region2: #{tpu_custom_call.1} parent=1 // loop_pre_header
      _
    $region3: #{tpu_custom_call.1} parent=1 // loop_header
      %s16 = sphi 0, %s20
      %p17 = scmp.ge.s32.totalorder %s16, 4
      %s23 = sphi 0, %s35
      %s24 = sphi 0, %s31
      %s25 = sphi 0, %s23
      %s26 = sphi 0, %s24
      %s27 = sphi 0, %s25
      %s28 = sphi 0, %s26
      %s40 = sphi 0, %s42
      %s43 = sphi 0, %s40
      %s44 = sphi 0, %s43
      %s60 = sphi 0, %s44
      %s64 = sphi 0, %s64
      %s66 = sphi 0, %s64
      %s67 = sphi 0, %s66
      %s81 = sphi 0, %s67
      %s85 = sphi 0, %s85
      %s87 = sphi 0, %s85
      %s88 = sphi 0, %s87
      %s102 = sphi 0, %s88
      %s110 = sphi 0, %s112
      %s113 = sphi 0, %s110
      %s114 = sphi 0, %s113
      %s130 = sphi 0, %s114
    $region4: #{tpu_custom_call.1} parent=1 // loop_header_branch
      %19 = sbr.rel (%p17) target = $region8
    $region5: #{tpu_custom_call.1} parent=1 // loop_body
      %s21 = ssub.s32 %s16, 1
      %s22 = ssub.s32 %s16, 2
      %s29 = sadd.s32 1, %s24
      %p30 = scmp.ge.s32.totalorder %s29, 1
      %s31 = scalar_select %p30, 0, %s29
      %s32 = sadd.s32 1, %s23
      %s33 = scalar_select %p30, %s32, %s23
      %p34 = scmp.ge.s32.totalorder %s33, 2
      %s35 = scalar_select %p34, 0, %s33
      %s36 = ssub.s32 %s23, %s35
      %s37 = ssub.s32 %s24, %s31
      %s38 = sor.u32 %s36, %s37
      %p39 = scmp.eq.s32.totalorder %s38, 0
      %s41 = sadd.s32 %s40, 1
      %s42 = scalar_select %p39, %s40, %s41
      %p45 = pneg %p39
      %p46 = scmp.eq.s32.totalorder %s16, 1
      %p47 = por %p45, %p46
      %p48 = scmp.ne.s32.totalorder %s40, %s43
      %p49 = scmp.eq.s32.totalorder %s16, 0
      %p50 = por %p48, %p49
      %p51 = scmp.ne.s32.totalorder %s40, %s43
      %p52 = scmp.eq.s32.totalorder %s21, 1
      %p53 = por %p51, %p52
      %p54 = scmp.ne.s32.totalorder %s43, %s44
      %p55 = scmp.eq.s32.totalorder %s21, 0
      %p56 = por %p54, %p55
      %p57 = scmp.ne.s32.totalorder %s43, %s44
      %p58 = scmp.eq.s32.totalorder %s22, 1
      %p59 = por %p57, %p58
      %p61 = scmp.ne.s32.totalorder %s44, %s60
      %p62 = scmp.eq.s32.totalorder %s22, 0
      %p63 = por %p61, %p62
      %s65 = sadd.s32 %s64, 1
      %p68 = scmp.eq.s32.totalorder %s16, 1
      %p69 = scmp.ne.s32.totalorder %s64, %s66
      %p70 = scmp.eq.s32.totalorder %s16, 0
      %p71 = por %p69, %p70
      %p72 = scmp.ne.s32.totalorder %s64, %s66
      %p73 = scmp.eq.s32.totalorder %s21, 1
      %p74 = por %p72, %p73
      %p75 = scmp.ne.s32.totalorder %s66, %s67
      %p76 = scmp.eq.s32.totalorder %s21, 0
      %p77 = por %p75, %p76
      %p78 = scmp.ne.s32.totalorder %s66, %s67
      %p79 = scmp.eq.s32.totalorder %s22, 1
      %p80 = por %p78, %p79
      %p82 = scmp.ne.s32.totalorder %s67, %s81
      %p83 = scmp.eq.s32.totalorder %s22, 0
      %p84 = por %p82, %p83
      %s86 = sadd.s32 %s85, 1
      %p89 = scmp.eq.s32.totalorder %s16, 1
      %p90 = scmp.ne.s32.totalorder %s85, %s87
      %p91 = scmp.eq.s32.totalorder %s16, 0
      %p92 = por %p90, %p91
      %p93 = scmp.ne.s32.totalorder %s85, %s87
      %p94 = scmp.eq.s32.totalorder %s21, 1
      %p95 = por %p93, %p94
      %p96 = scmp.ne.s32.totalorder %s87, %s88
      %p97 = scmp.eq.s32.totalorder %s21, 0
      %p98 = por %p96, %p97
      %p99 = scmp.ne.s32.totalorder %s87, %s88
      %p100 = scmp.eq.s32.totalorder %s22, 1
      %p101 = por %p99, %p100
      %p103 = scmp.ne.s32.totalorder %s88, %s102
      %p104 = scmp.eq.s32.totalorder %s22, 0
      %p105 = por %p103, %p104
      %s106 = ssub.s32 %s23, %s35
      %s107 = ssub.s32 %s24, %s31
      %s108 = sor.u32 %s106, %s107
      %p109 = scmp.eq.s32.totalorder %s108, 0
      %s111 = sadd.s32 %s110, 1
      %s112 = scalar_select %p109, %s110, %s111
      %p115 = pneg %p109
      %p116 = scmp.eq.s32.totalorder %s16, 1
      %p117 = por %p115, %p116
      %p118 = scmp.ne.s32.totalorder %s110, %s113
      %p119 = scmp.eq.s32.totalorder %s16, 0
      %p120 = por %p118, %p119
      %p121 = scmp.ne.s32.totalorder %s110, %s113
      %p122 = scmp.eq.s32.totalorder %s21, 1
      %p123 = por %p121, %p122
      %p124 = scmp.ne.s32.totalorder %s113, %s114
      %p125 = scmp.eq.s32.totalorder %s21, 0
      %p126 = por %p124, %p125
      %p127 = scmp.ne.s32.totalorder %s113, %s114
      %p128 = scmp.eq.s32.totalorder %s22, 1
      %p129 = por %p127, %p128
      %p131 = scmp.ne.s32.totalorder %s114, %s130
      %p132 = scmp.eq.s32.totalorder %s22, 0
      %p133 = por %p131, %p132
      %p134 = scmp.le.s32.totalorder 1, %s16
      %p135 = scmp.lt.s32.totalorder %s16, 3
      %p136 = pnand %p134, %p135
      %p137 = pneg %p136
      // Predicated region
      $region9: #{tpu_custom_call.1} parent=5 // pred_check
        _
      $region10: #{tpu_custom_call.1} parent=5 // pred_check_branch
        %139 = sbr.rel (%p136) target = $region12
      $region11: #{tpu_custom_call.1} parent=5 // pred_region
        %s140 = ssub.s32 %s16, 1
        // Predicated region
        $region13: #{tpu_custom_call.1} parent=11 // pred_check
          %p141 = pneg %p77
        $region14: #{tpu_custom_call.1} parent=11 // pred_check_branch
          %143 = sbr.rel (%p141) target = $region16
        $region15: #{tpu_custom_call.1} parent=11 // pred_region
          %s145 = ssub.s32 256, 256
          %146 = vsyncadd [#allocation6], %s145
          %s147 = sshll.u32 [#allocation5], 4
          %s148 = int_to_ptr.vmem [resolvable:$true] %s147
          %153 = dma.hbm_to_vmem [thread:$0]  %s1, 256, %s148, [#allocation6], 64, 64, 4
        $region16: #{tpu_custom_call.1} parent=11 // pred_fallthru
          _
        // Predicated region
        $region17: #{tpu_custom_call.1} parent=11 // pred_check
          %p154 = pneg %p98
        $region18: #{tpu_custom_call.1} parent=11 // pred_check_branch
          %156 = sbr.rel (%p154) target = $region20
        $region19: #{tpu_custom_call.1} parent=11 // pred_region
          _
        $region20: #{tpu_custom_call.1} parent=11 // pred_fallthru
          _
      $region12: #{tpu_custom_call.1} parent=5 // pred_fallthru
        _
      %p157 = scmp.lt.s32.totalorder %s16, 2
      // Predicated region
      $region21: #{tpu_custom_call.1} parent=5 // pred_check
        %p158 = pneg %p157
      $region22: #{tpu_custom_call.1} parent=5 // pred_check_branch
        %160 = sbr.rel (%p158) target = $region24
      $region23: #{tpu_custom_call.1} parent=5 // pred_region
        // Predicated region
        $region25: #{tpu_custom_call.1} parent=23 // pred_check
          %p161 = pneg %p50
        $region26: #{tpu_custom_call.1} parent=23 // pred_check_branch
          %163 = sbr.rel (%p161) target = $region28
        $region27: #{tpu_custom_call.1} parent=23 // pred_region
          %s164 = sand.u32 %s40, 1
          %s165 = scalar_lea.sflag [#allocation3], %s164
          %s166 = sand.u32 %s40, 1
          %s167 = smul.addr %s166, 4
          %s168 = scalar_lea.vmem [#allocation2], %s167
          %s170 = ssub.s32 64, 64
          %171 = vsyncadd %s165, %s170
          %s172 = sadd.s32 %s24, %s23
          %s173 = smul.addr %s172, 64
          %s174 = scalar_lea.hbm %s0, %s173
          %s176 = sshll.u32 %s168, 4
          %s177 = int_to_ptr.vmem [resolvable:$true] %s176
          %179 = dma.hbm_to_vmem [thread:$0]  %s174, 64, %s177, %s165
        $region28: #{tpu_custom_call.1} parent=23 // pred_fallthru
          _
      $region24: #{tpu_custom_call.1} parent=5 // pred_fallthru
        _
      %p180 = scmp.le.s32.totalorder 1, %s16
      %p181 = scmp.lt.s32.totalorder %s16, 3
      %p182 = pnand %p180, %p181
      %p183 = pneg %p182
      // Predicated region
      $region29: #{tpu_custom_call.1} parent=5 // pred_check
        _
      $region30: #{tpu_custom_call.1} parent=5 // pred_check_branch
        %185 = sbr.rel (%p182) target = $region32
      $region31: #{tpu_custom_call.1} parent=5 // pred_region
        %s186 = ssub.s32 %s16, 1
        %s187 = sand.u32 %s43, 1
        %s188 = scalar_lea.sflag [#allocation3], %s187
        %s189 = sand.u32 %s43, 1
        %s190 = smul.addr %s189, 4
        %s191 = scalar_lea.vmem [#allocation2], %s190
        // Predicated region
        $region33: #{tpu_custom_call.1} parent=31 // pred_check
          %p192 = pneg %p56
        $region34: #{tpu_custom_call.1} parent=31 // pred_check_branch
          %194 = sbr.rel (%p192) target = $region36
        $region35: #{tpu_custom_call.1} parent=31 // pred_region
          %195 = dma.done %s188, 64
        $region36: #{tpu_custom_call.1} parent=31 // pred_fallthru
          _
        // Predicated region
        $region37: #{tpu_custom_call.1} parent=31 // pred_check
          %p196 = pneg %p77
        $region38: #{tpu_custom_call.1} parent=31 // pred_check_branch
          %198 = sbr.rel (%p196) target = $region40
        $region39: #{tpu_custom_call.1} parent=31 // pred_region
          %199 = dma.done [#allocation6], 256
        $region40: #{tpu_custom_call.1} parent=31 // pred_fallthru
          _
        %s200 = sand.u32 %s43, 1
        %s201 = scalar_lea.sflag [#allocation3], %s200
        %s202 = sand.u32 %s43, 1
        %s203 = smul.addr %s202, 4
        %s204 = scalar_lea.vmem [#allocation2], %s203
        %p205 = pneg %p56
        %p206 = pneg %p53
        %p207 = pneg %p77
        %p208 = pneg %p74
        %p209 = pneg %p98
        %p210 = pneg %p95
        %p211 = pneg %p126
        %p212 = pneg %p123
        %s213 = sand.u32 %s113, 1
        %s214 = scalar_lea.sflag [#allocation4], %s213
        %s215 = sand.u32 %s113, 1
        %s216 = smul.addr %s215, 4
        %s217 = scalar_lea.vmem [#allocation7], %s216
        %v219 = vld [vmem:[%s191] sm:$0xf]
        %v220 = vld [vmem:[#allocation5] sm:$0xf]
        %v221 = vld [vmem:[#allocation5 + $0x4] sm:$0xf]
        %v222 = vld [vmem:[#allocation5 + $0x8] sm:$0xf]
        %v223 = vld [vmem:[#allocation5 + $0xc] sm:$0xf]
        %v224 = vld [vmem:[%s2] sm:$0x1]
        %v226 = vlaneseq
        %v227 = vshrl.u32 %v226, 7
        %v228 = vsub.s32 0, %v227
        %v229 = vrot.slane %v224, %v228
        %v235 = vunpack.c.l.b16 %v220
        %v236 = vunpack.c.l.b16 %v221
        %v237 = vunpack.c.l.b16 %v222
        %v238 = vunpack.c.l.b16 %v223
        %v239 = vpack.c.b16 %v236, %v235
        %v240 = vpack.c.b16 %v238, %v237
        %vm243 = vcmask 261120
        %v245 = vsel %vm243, %v219, 0
        %247 = vmatprep.subr.bf16.mxu0 0
        %248 = vmatpush1.bf16.msra.mxu0 %v239
        %249 = vmatprep.subr.bf16.mxu0 0
        %250 = vmatpush1.bf16.msra.mxu0 %v240
        %251 = vmatprep.subr.bf16.mxu0 0
        %252 = vmatpush1.bf16.msra.mxu0 0
        %253 = vmatprep.subr.bf16.mxu0 0
        %254 = vmatpush1.bf16.msra.mxu0 0
        %255 = vmatprep.subr.bf16.mxu0 0
        %256 = vmatpush1.bf16.msra.mxu0 0
        %257 = vmatprep.subr.bf16.mxu0 0
        %258 = vmatpush1.bf16.msra.mxu0 0
        %259 = vmatprep.subr.bf16.mxu0 0
        %260 = vmatpush1.bf16.msra.mxu0 0
        %261 = vmatprep.subr.bf16.mxu0 0
        %262 = vmatpush1.bf16.msra.mxu0 0
        %263 = vmatprep.subr.bf16.mxu0 0
        %264 = vmatpush1.bf16.msra.mxu0 0
        %265 = vmatprep.subr.bf16.mxu0 0
        %266 = vmatpush1.bf16.msra.mxu0 0
        %267 = vmatprep.subr.bf16.mxu0 0
        %268 = vmatpush1.bf16.msra.mxu0 0
        %269 = vmatprep.subr.bf16.mxu0 0
        %270 = vmatpush1.bf16.msra.mxu0 0
        %271 = vmatprep.subr.bf16.mxu0 0
        %272 = vmatpush1.bf16.msra.mxu0 0
        %273 = vmatprep.subr.bf16.mxu0 0
        %274 = vmatpush1.bf16.msra.mxu0 0
        %275 = vmatprep.subr.bf16.mxu0 0
        %276 = vmatpush1.bf16.msra.mxu0 0
        %277 = vmatprep.subr.bf16.mxu0 0
        %278 = vmatpush1.bf16.msra.mxu0 0
        %279 = vmatprep.mubr.bf16.mxu0 0
        %280 = vmatmul.mubr.bf16.gmra.mrb[0].mxu0 %v245
        %v281 = vpop.f32.mrb[0].mxu0
        %v282 = vadd.f32 %v229, %v281
        %v283 = vpop.f32.mrb[0].mxu0
        %v284 = vpop.f32.mrb[0].mxu0
        %v285 = vpop.f32.mrb[0].mxu0
        %286 = vdwg.mxu0
        %v287 = vpack.c.bf16 %v282, %v282
        %vm288 = vcmask 257024
        %289 = vst.msk [vmem:[%s217] sm:$0xf] %vm288, %v287
        %s290 = sand.u32 %s113, 1
        %s291 = scalar_lea.sflag [#allocation4], %s290
        %s292 = sand.u32 %s113, 1
        %s293 = smul.addr %s292, 4
        %s294 = scalar_lea.vmem [#allocation7], %s293
        // Predicated region
        $region41: #{tpu_custom_call.1} parent=31 // pred_check
          %p295 = pneg %p123
        $region42: #{tpu_custom_call.1} parent=31 // pred_check_branch
          %297 = sbr.rel (%p295) target = $region44
        $region43: #{tpu_custom_call.1} parent=31 // pred_region
          %s299 = ssub.s32 64, 64
          %300 = vsyncadd %s291, %s299
          %s301 = sadd.s32 %s26, %s25
          %s302 = smul.addr %s301, 64
          %s303 = scalar_lea.hbm %s3, %s302
          %s305 = sshll.u32 %s294, 4
          %s306 = int_to_ptr.vmem [resolvable:$true] %s305
          %308 = dma.vmem_to_hbm [thread:$0]  %s306, 64, %s303, %s291
        $region44: #{tpu_custom_call.1} parent=31 // pred_fallthru
          _
      $region32: #{tpu_custom_call.1} parent=5 // pred_fallthru
        _
      %p309 = scmp.le.s32.totalorder 2, %s16
      // Predicated region
      $region45: #{tpu_custom_call.1} parent=5 // pred_check
        %p310 = pneg %p309
      $region46: #{tpu_custom_call.1} parent=5 // pred_check_branch
        %312 = sbr.rel (%p310) target = $region48
      $region47: #{tpu_custom_call.1} parent=5 // pred_region
        %s313 = ssub.s32 %s16, 2
        // Predicated region
        $region49: #{tpu_custom_call.1} parent=47 // pred_check
          %p314 = pneg %p129
        $region50: #{tpu_custom_call.1} parent=47 // pred_check_branch
          %316 = sbr.rel (%p314) target = $region52
        $region51: #{tpu_custom_call.1} parent=47 // pred_region
          %s317 = sand.u32 %s114, 1
          %s318 = scalar_lea.sflag [#allocation4], %s317
          %s319 = sand.u32 %s114, 1
          %s320 = smul.addr %s319, 4
          %s321 = scalar_lea.vmem [#allocation7], %s320
          %322 = dma.done %s318, 64
        $region52: #{tpu_custom_call.1} parent=47 // pred_fallthru
          _
      $region48: #{tpu_custom_call.1} parent=5 // pred_fallthru
        _
    $region6: #{tpu_custom_call.1} parent=1 // loop_footer
      %s20 = sadd.s32 1, %s16
    $region7: #{tpu_custom_call.1} parent=1 // loop_footer_branch
      %15 = sbr.rel target = $region3
    $region8: #{tpu_custom_call.1} parent=1 // loop_exit
      _
    %323 = vsyncpa [#allocation3], 1
    %s324 = scalar_lea.sflag [#allocation3], 1
    %325 = vsyncpa %s324, 1
    %326 = vsyncpa [#allocation6], 1
    %327 = vsyncpa [#allocation4], 1
    %s328 = scalar_lea.sflag [#allocation4], 1
    %329 = vsyncpa %s328, 1

</llo_original>
